<compile_context>
chip_gen: v5e
topology: v5e:2x2
jax: 0.10.0
libtpu: 0.0.40
codegen_flags: <defaults>
</compile_context>

<pallas_src>
import jax
import jax.numpy as jnp
from jax.experimental import pallas as pl
from jax.experimental.pallas import tpu as pltpu

EMBED_DIM = 5
CONTEXT_SIZE = 2
HIDDEN = 128
NEG_INF = -1e30       # finite "minus infinity" for masked (padded) vocab lanes

raw_text = (
    'We are about to study the idea of a computational process.\n'
    'Computational processes are abstract beings that inhabit computers.\n'
    'As they evolve, processes manipulate other abstract things called data.\n'
    'The evolution of a process is directed by a pattern of rules\n'
    'called a program. People create programs to direct processes. In effect,\n'
    'we conjure the spirits of the computer with our spells.'
).split()

VOCAB_SIZE = len(set(raw_text))                 # 49
IN_DIM = CONTEXT_SIZE * EMBED_DIM               # 10
V_PAD = pl.cdiv(VOCAB_SIZE, 128) * 128          # 128 (lane-dense output / one-hot width)
K_FUSED = CONTEXT_SIZE * V_PAD                  # 256 (fills v6e/v7x MXU depth)


def ngram_kernel(tok_ref, t_ref, b1_ref, w2_ref, b2_ref, out_ref):
    # tok: (TILE, C) int32            t:  (C*V_PAD, HIDDEN) f32  (embedding @ w1, padded)
    # b1:  (1, HIDDEN) f32            w2: (HIDDEN, V_PAD) f32 (pad cols = 0)
    # b2:  (1, V_PAD) f32 (pad lanes = -1e30)
    tok = tok_ref[...]
    tile = tok.shape[0]

    # Fused embedding-gather + linear1: one-hot(tokens) @ T, a single
    # (TILE, 256) @ (256, 128) MXU matmul (per-position one-hots concatenated
    # along K).  Padded table rows (>= VOCAB_SIZE per position) are never hit.
    v_iota = jax.lax.broadcasted_iota(jnp.int32, (tile, V_PAD), 1)
    onehot = jnp.concatenate(
        [(tok[:, c:c + 1] == v_iota).astype(jnp.float32)
         for c in range(CONTEXT_SIZE)],
        axis=-1)                                               # (TILE, C*V_PAD)

    h = jnp.dot(onehot, t_ref[...], preferred_element_type=jnp.float32) + b1_ref[...]
    h = jnp.maximum(h, 0.0)                                    # ReLU (f32)

    logits = jnp.dot(h, w2_ref[...], preferred_element_type=jnp.float32) + b2_ref[...]

    # log_softmax over the lane dim.  Padded lanes carry -1e30 via b2 (w2 pad
    # columns are zero), so they never win the max and their exp underflows to
    # 0 in the sum -- all stores are full 128-lane vst's.
    m = jnp.max(logits, axis=-1, keepdims=True)
    lse = m + jnp.log(jnp.sum(jnp.exp(logits - m), axis=-1, keepdims=True))
    out_ref[...] = (logits - lse).astype(out_ref.dtype)


def _choose_tile_m(batch):
    # Big tiles amortize the ~0.35us/grid-step overhead; keep >=2 grid steps
    # (when the batch allows) so the "parallel" axis uses both v7x TCs.
    # 512 rows is plenty to reach the HBM roofline and trivially fits VMEM.
    half = max(8, ((batch + 1) // 2 + 7) // 8 * 8)   # ceil(B/2), rounded up to 8
    return min(512, half)


def prepare_params(embedding, w1, b1, w2, b2):
    """One-time weight prep (hoisted out of the per-call hot path)."""
    hp = jax.lax.Precision.HIGHEST
    tables = []
    for c in range(CONTEXT_SIZE):
        t_c = jnp.dot(embedding, w1[c * EMBED_DIM:(c + 1) * EMBED_DIM, :],
                      precision=hp)                             # (V, HIDDEN)
        tables.append(jnp.pad(t_c, ((0, V_PAD - VOCAB_SIZE), (0, 0))))
    t_cat = jnp.concatenate(tables, axis=0)                     # (C*V_PAD, HIDDEN)

    pad_v = V_PAD - VOCAB_SIZE
    w2_p = jnp.pad(w2, ((0, 0), (0, pad_v)))                    # (HIDDEN, V_PAD)
    b2_p = jnp.pad(b2, ((0, 0), (0, pad_v)), constant_values=NEG_INF)
    return t_cat, b1, w2_p, b2_p


@jax.jit
def ngram_forward_padded(tokens, t_cat, b1, w2_p, b2_p):
    """Hot path.  tokens: (B, C) or (C,) int32 -> (b_pad, V_PAD) f32 log-probs.

    Returns the padded slab (no post-kernel slice => no extra HBM pass).
    Contract for consumers: vocab lanes >= VOCAB_SIZE hold ~-1e30, batch rows
    >= B are garbage-but-finite; mask them or fuse the consumer.
    """
    tokens = jnp.atleast_2d(tokens).astype(jnp.int32)
    B = tokens.shape[0]
    tile_m = _choose_tile_m(B)
    b_pad = pl.cdiv(B, tile_m) * tile_m
    if b_pad != B:
        tokens = jnp.pad(tokens, ((0, b_pad - B), (0, 0)))

    return pl.pallas_call(
        ngram_kernel,
        out_shape=jax.ShapeDtypeStruct((b_pad, V_PAD), jnp.float32),
        grid=(b_pad // tile_m,),
        in_specs=[
            pl.BlockSpec((tile_m, CONTEXT_SIZE), lambda i: (i, 0)),   # token tile
            pl.BlockSpec((K_FUSED, HIDDEN), lambda i: (0, 0)),        # fused table
            pl.BlockSpec((1, HIDDEN), lambda i: (0, 0)),              # b1      (resident:
            pl.BlockSpec((HIDDEN, V_PAD), lambda i: (0, 0)),          # w2       constant block
            pl.BlockSpec((1, V_PAD), lambda i: (0, 0)),               # b2       index => 1 DMA)
        ],
        out_specs=pl.BlockSpec((tile_m, V_PAD), lambda i: (i, 0)),
        compiler_params=pltpu.CompilerParams(
            dimension_semantics=("parallel",)),                       # v7x: 2 TCs split batch
    )(tokens, t_cat, b1, w2_p, b2_p)


def ngram_forward(tokens, t_cat, b1, w2_p, b2_p):
    """Convenience wrapper with exact nn.Module output shape (B, VOCAB_SIZE).

    Prefer ngram_forward_padded in hot loops: this slice re-reads/re-writes the
    whole output array.
    """
    B = jnp.atleast_2d(tokens).shape[0]
    return ngram_forward_padded(tokens, t_cat, b1, w2_p, b2_p)[:B, :VOCAB_SIZE]


def init_params(key):
    k_emb, k_w1, k_b1, k_w2, k_b2 = jax.random.split(key, 5)
    embedding = jax.random.normal(k_emb, (VOCAB_SIZE, EMBED_DIM), jnp.float32)
    # Weights stored (in, out); same math as PyTorch x @ W.T.
    w1 = jax.random.normal(k_w1, (IN_DIM, HIDDEN), jnp.float32) * (1.0 / jnp.sqrt(IN_DIM))
    b1 = jax.random.normal(k_b1, (1, HIDDEN), jnp.float32) * 0.01
    w2 = jax.random.normal(k_w2, (HIDDEN, VOCAB_SIZE), jnp.float32) * (1.0 / jnp.sqrt(HIDDEN))
    b2 = jax.random.normal(k_b2, (1, VOCAB_SIZE), jnp.float32) * 0.01
    return embedding, w1, b1, w2, b2


def _reference(tokens, embedding, w1, b1, w2, b2):
    # Pure f32 reference matching the PyTorch module math.
    hp = jax.lax.Precision.HIGHEST
    tokens = jnp.atleast_2d(tokens)
    x = embedding[tokens].reshape(tokens.shape[0], IN_DIM)
    h = jnp.maximum(jnp.dot(x, w1, precision=hp) + b1, 0.0)
    logits = jnp.dot(h, w2, precision=hp) + b2
    return jax.nn.log_softmax(logits, axis=-1)


if __name__ == "__main__":
    key = jax.random.PRNGKey(0)
    embedding, w1, b1, w2, b2 = init_params(key)
    prepped = prepare_params(embedding, w1, b1, w2, b2)   # one-time weight prep

    k_in1, k_in2 = jax.random.split(jax.random.split(key, 6)[5])

    # Batched example: 256 contexts -> tile 128, 2 grid steps.
    inputs = jax.random.randint(k_in1, (256, CONTEXT_SIZE), 0, VOCAB_SIZE, dtype=jnp.int32)
    lp_pad = jax.block_until_ready(ngram_forward_padded(inputs, *prepped))
    assert lp_pad.shape == (256, V_PAD)
    lp = lp_pad[:256, :VOCAB_SIZE]
    ref = _reference(inputs, embedding, w1, b1, w2, b2)
    assert jnp.allclose(lp, ref, atol=1e-2, rtol=1e-2), (
        f"mismatch vs reference, max err {float(jnp.max(jnp.abs(lp - ref)))}")

    # Larger batch: 1024 contexts -> tile 512 (target tile), 2 grid steps.
    inputs_big = jax.random.randint(k_in2, (1024, CONTEXT_SIZE), 0, VOCAB_SIZE, dtype=jnp.int32)
    lp_big = jax.block_until_ready(ngram_forward(inputs_big, *prepped))
    assert lp_big.shape == (1024, VOCAB_SIZE)
    ref_big = _reference(inputs_big, embedding, w1, b1, w2, b2)
    assert jnp.allclose(lp_big, ref_big, atol=1e-2, rtol=1e-2), (
        f"big-batch mismatch, max err {float(jnp.max(jnp.abs(lp_big - ref_big)))}")

    # Original single-context semantics (1-D index vector, like the nn.Module).
    single = jnp.array([3, 7], dtype=jnp.int32)
    lp1 = jax.block_until_ready(ngram_forward(single, *prepped))
    assert lp1.shape == (1, VOCAB_SIZE)
    ref1 = _reference(single, embedding, w1, b1, w2, b2)
    assert jnp.allclose(lp1, ref1, atol=1e-2, rtol=1e-2), "single-context mismatch"

    print("KERNEL_OK")
</pallas_src>

<mosaic_0001>
module attributes {stable_mosaic.version = 11 : i64} {
  func.func @ngram_kernel(%arg0: i32, %arg1: memref<128x2xi32, #tpu.memory_space<vmem>>, %arg2: memref<256x128xf32, #tpu.memory_space<vmem>>, %arg3: memref<1x128xf32, #tpu.memory_space<vmem>>, %arg4: memref<128x128xf32, #tpu.memory_space<vmem>>, %arg5: memref<1x128xf32, #tpu.memory_space<vmem>>, %arg6: memref<128x128xf32, #tpu.memory_space<vmem>>) attributes {dimension_semantics = [#tpu.dimension_semantics<parallel>], iteration_bounds = array<i64: 2>, scalar_prefetch = 0 : i64, scratch_operands = 0 : i64, tpu.core_type = #tpu.core_type<tc>, window_params = [{transform_indices = @transform_0, window_bounds = array<i64: 128, 2>}, {pipeline_mode = #tpu.pipeline_mode<synchronous>, transform_indices = @transform_1, window_bounds = array<i64: 256, 128>}, {pipeline_mode = #tpu.pipeline_mode<synchronous>, transform_indices = @transform_2, window_bounds = array<i64: 1, 128>}, {pipeline_mode = #tpu.pipeline_mode<synchronous>, transform_indices = @transform_3, window_bounds = array<i64: 128, 128>}, {pipeline_mode = #tpu.pipeline_mode<synchronous>, transform_indices = @transform_4, window_bounds = array<i64: 1, 128>}, {transform_indices = @transform_5, window_bounds = array<i64: 128, 128>}]} {
    %c0 = arith.constant 0 : index
    %c0_0 = arith.constant 0 : index
    %0 = vector.load %arg1[%c0, %c0_0] : memref<128x2xi32, #tpu.memory_space<vmem>>, vector<128x2xi32>
    %1 = tpu.iota {dimensions = array<i32: 1>} : vector<128x128xi32>
    %2 = vector.extract_strided_slice %0 {offsets = [0, 0], sizes = [128, 1], strides = [1, 1]} : vector<128x2xi32> to vector<128x1xi32>
    %3 = vector.broadcast %2 : vector<128x1xi32> to vector<128x128xi32>
    %4 = arith.cmpi eq, %3, %1 : vector<128x128xi32>
    %5 = arith.extui %4 : vector<128x128xi1> to vector<128x128xi32>
    %6 = arith.sitofp %5 : vector<128x128xi32> to vector<128x128xf32>
    %7 = vector.extract_strided_slice %0 {offsets = [0, 1], sizes = [128, 1], strides = [1, 1]} : vector<128x2xi32> to vector<128x1xi32>
    %8 = vector.broadcast %7 : vector<128x1xi32> to vector<128x128xi32>
    %9 = arith.cmpi eq, %8, %1 : vector<128x128xi32>
    %10 = arith.extui %9 : vector<128x128xi1> to vector<128x128xi32>
    %11 = arith.sitofp %10 : vector<128x128xi32> to vector<128x128xf32>
    %12 = tpu.concatenate %6, %11 in 1 : vector<128x128xf32>, vector<128x128xf32> -> vector<128x256xf32>
    %c0_1 = arith.constant 0 : index
    %c0_2 = arith.constant 0 : index
    %13 = vector.load %arg2[%c0_1, %c0_2] : memref<256x128xf32, #tpu.memory_space<vmem>>, vector<256x128xf32>
    %cst = arith.constant dense<0.000000e+00> : vector<128x128xf32>
    %14 = tpu.matmul %12, %13, %cst {dimension_numbers = #tpu.dot_dimension_numbers<[1], [0], [0], [1], [0, 0, 1, 1], [], []>} : vector<128x256xf32>, vector<256x128xf32>, vector<128x128xf32> -> vector<128x128xf32>
    %c0_3 = arith.constant 0 : index
    %c0_4 = arith.constant 0 : index
    %15 = vector.load %arg3[%c0_3, %c0_4] : memref<1x128xf32, #tpu.memory_space<vmem>>, vector<1x128xf32>
    %16 = vector.broadcast %15 : vector<1x128xf32> to vector<128x128xf32>
    %17 = arith.addf %14, %16 : vector<128x128xf32>
    %cst_5 = arith.constant 0.000000e+00 : f32
    %18 = vector.broadcast %cst_5 : f32 to vector<128x128xf32>
    %19 = arith.maximumf %17, %18 : vector<128x128xf32>
    %c0_6 = arith.constant 0 : index
    %c0_7 = arith.constant 0 : index
    %20 = vector.load %arg4[%c0_6, %c0_7] : memref<128x128xf32, #tpu.memory_space<vmem>>, vector<128x128xf32>
    %cst_8 = arith.constant dense<0.000000e+00> : vector<128x128xf32>
    %21 = tpu.matmul %19, %20, %cst_8 {dimension_numbers = #tpu.dot_dimension_numbers<[1], [0], [0], [1], [0, 0, 1, 1], [], []>} : vector<128x128xf32>, vector<128x128xf32>, vector<128x128xf32> -> vector<128x128xf32>
    %c0_9 = arith.constant 0 : index
    %c0_10 = arith.constant 0 : index
    %22 = vector.load %arg5[%c0_9, %c0_10] : memref<1x128xf32, #tpu.memory_space<vmem>>, vector<1x128xf32>
    %23 = vector.broadcast %22 : vector<1x128xf32> to vector<128x128xf32>
    %24 = arith.addf %21, %23 : vector<128x128xf32>
    %cst_11 = arith.constant dense<0xFF800000> : vector<128xf32>
    %25 = vector.multi_reduction <maximumf>, %24, %cst_11 [1] : vector<128x128xf32> to vector<128xf32>
    %26 = vector.shape_cast %25 : vector<128xf32> to vector<128x1xf32>
    %27 = vector.broadcast %26 : vector<128x1xf32> to vector<128x128xf32>
    %28 = arith.subf %24, %27 : vector<128x128xf32>
    %29 = math.exp %28 : vector<128x128xf32>
    %cst_12 = arith.constant dense<0.000000e+00> : vector<128xf32>
    %30 = vector.multi_reduction <add>, %29, %cst_12 [1] : vector<128x128xf32> to vector<128xf32>
    %31 = vector.shape_cast %30 : vector<128xf32> to vector<128x1xf32>
    %32 = math.log %31 : vector<128x1xf32>
    %33 = arith.addf %26, %32 : vector<128x1xf32>
    %34 = vector.broadcast %33 : vector<128x1xf32> to vector<128x128xf32>
    %35 = arith.subf %24, %34 : vector<128x128xf32>
    %c0_13 = arith.constant 0 : index
    %c0_14 = arith.constant 0 : index
    %36 = vector.load %arg6[%c0_13, %c0_14] : memref<128x128xf32, #tpu.memory_space<vmem>>, vector<128x128xf32>
    tpu.vector_store %arg6[%c0_13, %c0_14], %35 {strides = array<i32>} : memref<128x128xf32, #tpu.memory_space<vmem>>, vector<128x128xf32>,
    return
  }
  func.func @transform_0(%arg0: i32) -> (i32, i32) {
    %c0_i32 = arith.constant 0 : i32
    %c0_i32_0 = arith.constant 0 : i32
    return %arg0, %c0_i32 : i32, i32
  }
  func.func @transform_1(%arg0: i32) -> (i32, i32) {
    %c0_i32 = arith.constant 0 : i32
    %c0_i32_0 = arith.constant 0 : i32
    %c0_i32_1 = arith.constant 0 : i32
    return %c0_i32, %c0_i32_0 : i32, i32
  }
  func.func @transform_2(%arg0: i32) -> (i32, i32) {
    %c0_i32 = arith.constant 0 : i32
    %c0_i32_0 = arith.constant 0 : i32
    %c0_i32_1 = arith.constant 0 : i32
    return %c0_i32, %c0_i32_0 : i32, i32
  }
  func.func @transform_3(%arg0: i32) -> (i32, i32) {
    %c0_i32 = arith.constant 0 : i32
    %c0_i32_0 = arith.constant 0 : i32
    %c0_i32_1 = arith.constant 0 : i32
    return %c0_i32, %c0_i32_0 : i32, i32
  }
  func.func @transform_4(%arg0: i32) -> (i32, i32) {
    %c0_i32 = arith.constant 0 : i32
    %c0_i32_0 = arith.constant 0 : i32
    %c0_i32_1 = arith.constant 0 : i32
    return %c0_i32, %c0_i32_0 : i32, i32
  }
  func.func @transform_5(%arg0: i32) -> (i32, i32) {
    %c0_i32 = arith.constant 0 : i32
    %c0_i32_0 = arith.constant 0 : i32
    return %arg0, %c0_i32 : i32, i32
  }
}

</mosaic_0001>

<llo_original>
// kernel: ngram_forward_padded.1
$region0: #{ngram_forward_padded.1}
  #allocation0 [shape = 'u32[]', space=smem, size = 0x4, offset = 0x4, fixed_abs, tag = 'smem constant byte address 0x4 - core index']
  #allocation1 [shape = 'u32[72,128]{1,0:T(1,128)}', space=vmem, size = 0x9000, scoped, tag = 'internal scratch']
  %s0 = inlined_call_operand.vmem [shape: s32[256,2], index: 0, kind: input, shape index: {}]
  %s1 = inlined_call_operand.vmem [shape: f32[256,128], index: 1, kind: input, shape index: {}]
  %s2 = inlined_call_operand.vmem [shape: f32[1,128], index: 2, kind: input, shape index: {}]
  %s3 = inlined_call_operand.hbm [shape: f32[128,128], index: 3, kind: input, shape index: {}]
  %s4 = inlined_call_operand.vmem [shape: f32[1,128], index: 4, kind: input, shape index: {}]
  %s5 = inlined_call_operand.hbm [shape: f32[256,128], index: 5, kind: output, shape index: {}]
  %s6 = sld [smem:[#allocation0]]
  $region57: #{ngram_forward_padded.1} parent=0
    _
  %s8 = ssub.s32 1, %s6
  %s9 = scalar_select 0, %s8, %s6
  $region1: #{ngram_forward_padded.1} parent=0
    #allocation2 [shape = 'u8[65536]{0}', space=vmem, size = 0x10000, scoped, tag = 'input window, operand 3, single buffered']
    #allocation3 [shape = 's32[2]{0}', space=sflag, size = 0x8, scoped, tag = 'scoped memory for ngram_forward_padded.1']
    #allocation4 [shape = 's32[2]{0}', space=sflag, size = 0x8, scoped, tag = 'scoped memory for ngram_forward_padded.1']
    #allocation5 [shape = 'u8[131072]{0}', space=vmem, size = 0x20000, scoped, tag = 'output window, operand 0']
    %10 = vsyncpa [#allocation3], 0
    %11 = vsyncpa [#allocation4], 0
    %s12 = scalar_lea.sflag [#allocation4], 1
    %13 = vsyncpa %s12, 0
    loop: start=0, step=1, limit=4
    $region2: #{ngram_forward_padded.1} parent=1 // loop_pre_header
      _
    $region3: #{ngram_forward_padded.1} parent=1 // loop_header
      %s15 = sphi 0, %s19
      %p16 = scmp.ge.s32.totalorder %s15, 4
      %s25 = sphi 0, %s27
      %s28 = sphi 0, %s25
      %s29 = sphi 0, %s28
      %s45 = sphi 0, %s29
      %s49 = sphi 0, %s49
      %s51 = sphi 0, %s49
      %s52 = sphi 0, %s51
      %s66 = sphi 0, %s52
      %s70 = sphi 0, %s70
      %s72 = sphi 0, %s70
      %s73 = sphi 0, %s72
      %s87 = sphi 0, %s73
      %s91 = sphi 0, %s91
      %s93 = sphi 0, %s91
      %s94 = sphi 0, %s93
      %s108 = sphi 0, %s94
      %s112 = sphi 0, %s112
      %s114 = sphi 0, %s112
      %s115 = sphi 0, %s114
      %s129 = sphi 0, %s115
      %s135 = sphi 0, %s137
      %s138 = sphi 0, %s135
      %s139 = sphi 0, %s138
      %s155 = sphi 0, %s139
    $region4: #{ngram_forward_padded.1} parent=1 // loop_header_branch
      %18 = sbr.rel (%p16) target = $region8
    $region5: #{ngram_forward_padded.1} parent=1 // loop_body
      %s20 = ssub.s32 %s15, 1
      %s21 = ssub.s32 %s15, 2
      %s22 = sadd.s32 %s15, 1
      %s23 = ssub.s32 %s15, %s22
      %p24 = scmp.eq.s32.totalorder %s23, 0
      %s26 = sadd.s32 %s25, 1
      %s27 = scalar_select %p24, %s25, %s26
      %p30 = pneg %p24
      %p31 = scmp.eq.s32.totalorder %s15, 1
      %p32 = por %p30, %p31
      %p33 = scmp.ne.s32.totalorder %s25, %s28
      %p34 = scmp.eq.s32.totalorder %s15, 0
      %p35 = por %p33, %p34
      %p36 = scmp.ne.s32.totalorder %s25, %s28
      %p37 = scmp.eq.s32.totalorder %s20, 1
      %p38 = por %p36, %p37
      %p39 = scmp.ne.s32.totalorder %s28, %s29
      %p40 = scmp.eq.s32.totalorder %s20, 0
      %p41 = por %p39, %p40
      %p42 = scmp.ne.s32.totalorder %s28, %s29
      %p43 = scmp.eq.s32.totalorder %s21, 1
      %p44 = por %p42, %p43
      %p46 = scmp.ne.s32.totalorder %s29, %s45
      %p47 = scmp.eq.s32.totalorder %s21, 0
      %p48 = por %p46, %p47
      %s50 = sadd.s32 %s49, 1
      %p53 = scmp.eq.s32.totalorder %s15, 1
      %p54 = scmp.ne.s32.totalorder %s49, %s51
      %p55 = scmp.eq.s32.totalorder %s15, 0
      %p56 = por %p54, %p55
      %p57 = scmp.ne.s32.totalorder %s49, %s51
      %p58 = scmp.eq.s32.totalorder %s20, 1
      %p59 = por %p57, %p58
      %p60 = scmp.ne.s32.totalorder %s51, %s52
      %p61 = scmp.eq.s32.totalorder %s20, 0
      %p62 = por %p60, %p61
      %p63 = scmp.ne.s32.totalorder %s51, %s52
      %p64 = scmp.eq.s32.totalorder %s21, 1
      %p65 = por %p63, %p64
      %p67 = scmp.ne.s32.totalorder %s52, %s66
      %p68 = scmp.eq.s32.totalorder %s21, 0
      %p69 = por %p67, %p68
      %s71 = sadd.s32 %s70, 1
      %p74 = scmp.eq.s32.totalorder %s15, 1
      %p75 = scmp.ne.s32.totalorder %s70, %s72
      %p76 = scmp.eq.s32.totalorder %s15, 0
      %p77 = por %p75, %p76
      %p78 = scmp.ne.s32.totalorder %s70, %s72
      %p79 = scmp.eq.s32.totalorder %s20, 1
      %p80 = por %p78, %p79
      %p81 = scmp.ne.s32.totalorder %s72, %s73
      %p82 = scmp.eq.s32.totalorder %s20, 0
      %p83 = por %p81, %p82
      %p84 = scmp.ne.s32.totalorder %s72, %s73
      %p85 = scmp.eq.s32.totalorder %s21, 1
      %p86 = por %p84, %p85
      %p88 = scmp.ne.s32.totalorder %s73, %s87
      %p89 = scmp.eq.s32.totalorder %s21, 0
      %p90 = por %p88, %p89
      %s92 = sadd.s32 %s91, 1
      %p95 = scmp.eq.s32.totalorder %s15, 1
      %p96 = scmp.ne.s32.totalorder %s91, %s93
      %p97 = scmp.eq.s32.totalorder %s15, 0
      %p98 = por %p96, %p97
      %p99 = scmp.ne.s32.totalorder %s91, %s93
      %p100 = scmp.eq.s32.totalorder %s20, 1
      %p101 = por %p99, %p100
      %p102 = scmp.ne.s32.totalorder %s93, %s94
      %p103 = scmp.eq.s32.totalorder %s20, 0
      %p104 = por %p102, %p103
      %p105 = scmp.ne.s32.totalorder %s93, %s94
      %p106 = scmp.eq.s32.totalorder %s21, 1
      %p107 = por %p105, %p106
      %p109 = scmp.ne.s32.totalorder %s94, %s108
      %p110 = scmp.eq.s32.totalorder %s21, 0
      %p111 = por %p109, %p110
      %s113 = sadd.s32 %s112, 1
      %p116 = scmp.eq.s32.totalorder %s15, 1
      %p117 = scmp.ne.s32.totalorder %s112, %s114
      %p118 = scmp.eq.s32.totalorder %s15, 0
      %p119 = por %p117, %p118
      %p120 = scmp.ne.s32.totalorder %s112, %s114
      %p121 = scmp.eq.s32.totalorder %s20, 1
      %p122 = por %p120, %p121
      %p123 = scmp.ne.s32.totalorder %s114, %s115
      %p124 = scmp.eq.s32.totalorder %s20, 0
      %p125 = por %p123, %p124
      %p126 = scmp.ne.s32.totalorder %s114, %s115
      %p127 = scmp.eq.s32.totalorder %s21, 1
      %p128 = por %p126, %p127
      %p130 = scmp.ne.s32.totalorder %s115, %s129
      %p131 = scmp.eq.s32.totalorder %s21, 0
      %p132 = por %p130, %p131
      %s133 = ssub.s32 %s15, %s22
      %p134 = scmp.eq.s32.totalorder %s133, 0
      %s136 = sadd.s32 %s135, 1
      %s137 = scalar_select %p134, %s135, %s136
      %p140 = pneg %p134
      %p141 = scmp.eq.s32.totalorder %s15, 1
      %p142 = por %p140, %p141
      %p143 = scmp.ne.s32.totalorder %s135, %s138
      %p144 = scmp.eq.s32.totalorder %s15, 0
      %p145 = por %p143, %p144
      %p146 = scmp.ne.s32.totalorder %s135, %s138
      %p147 = scmp.eq.s32.totalorder %s20, 1
      %p148 = por %p146, %p147
      %p149 = scmp.ne.s32.totalorder %s138, %s139
      %p150 = scmp.eq.s32.totalorder %s20, 0
      %p151 = por %p149, %p150
      %p152 = scmp.ne.s32.totalorder %s138, %s139
      %p153 = scmp.eq.s32.totalorder %s21, 1
      %p154 = por %p152, %p153
      %p156 = scmp.ne.s32.totalorder %s139, %s155
      %p157 = scmp.eq.s32.totalorder %s21, 0
      %p158 = por %p156, %p157
      %p159 = scmp.le.s32.totalorder 1, %s15
      %p160 = scmp.lt.s32.totalorder %s15, 3
      %p161 = pnand %p159, %p160
      %p162 = pneg %p161
      // Predicated region
      $region9: #{ngram_forward_padded.1} parent=5 // pred_check
        _
      $region10: #{ngram_forward_padded.1} parent=5 // pred_check_branch
        %164 = sbr.rel (%p161) target = $region12
      $region11: #{ngram_forward_padded.1} parent=5 // pred_region
        %s165 = ssub.s32 %s15, 1
        // Predicated region
        $region13: #{ngram_forward_padded.1} parent=11 // pred_check
          %p166 = pneg %p62
        $region14: #{ngram_forward_padded.1} parent=11 // pred_check_branch
          %168 = sbr.rel (%p166) target = $region16
        $region15: #{ngram_forward_padded.1} parent=11 // pred_region
          _
        $region16: #{ngram_forward_padded.1} parent=11 // pred_fallthru
          _
        // Predicated region
        $region17: #{ngram_forward_padded.1} parent=11 // pred_check
          %p169 = pneg %p83
        $region18: #{ngram_forward_padded.1} parent=11 // pred_check_branch
          %171 = sbr.rel (%p169) target = $region20
        $region19: #{ngram_forward_padded.1} parent=11 // pred_region
          _
        $region20: #{ngram_forward_padded.1} parent=11 // pred_fallthru
          _
        // Predicated region
        $region21: #{ngram_forward_padded.1} parent=11 // pred_check
          %p172 = pneg %p104
        $region22: #{ngram_forward_padded.1} parent=11 // pred_check_branch
          %174 = sbr.rel (%p172) target = $region24
        $region23: #{ngram_forward_padded.1} parent=11 // pred_region
          %176 = vsyncadd [#allocation3], 0
          %s177 = sshll.u32 %s3, 4
          %s178 = int_to_ptr.hbm [resolvable:$true] %s177
          %s179 = sshll.u32 [#allocation2], 4
          %s180 = int_to_ptr.vmem [resolvable:$true] %s179
          %185 = dma.hbm_to_vmem [thread:$0]  %s178, 2048, %s180, [#allocation3], 128, 128, 8
        $region24: #{ngram_forward_padded.1} parent=11 // pred_fallthru
          _
        // Predicated region
        $region25: #{ngram_forward_padded.1} parent=11 // pred_check
          %p186 = pneg %p125
        $region26: #{ngram_forward_padded.1} parent=11 // pred_check_branch
          %188 = sbr.rel (%p186) target = $region28
        $region27: #{ngram_forward_padded.1} parent=11 // pred_region
          _
        $region28: #{ngram_forward_padded.1} parent=11 // pred_fallthru
          _
      $region12: #{ngram_forward_padded.1} parent=5 // pred_fallthru
        _
      %p189 = scmp.lt.s32.totalorder %s15, 2
      // Predicated region
      $region29: #{ngram_forward_padded.1} parent=5 // pred_check
        %p190 = pneg %p189
      $region30: #{ngram_forward_padded.1} parent=5 // pred_check_branch
        %192 = sbr.rel (%p190) target = $region32
      $region31: #{ngram_forward_padded.1} parent=5 // pred_region
        // Predicated region
        $region33: #{ngram_forward_padded.1} parent=31 // pred_check
          %p193 = pneg %p35
        $region34: #{ngram_forward_padded.1} parent=31 // pred_check_branch
          %195 = sbr.rel (%p193) target = $region36
        $region35: #{ngram_forward_padded.1} parent=31 // pred_region
          %s196 = smul.u32 16, %s15
          %p197 = scmp.lt.s32.totalorder %s196, 31
          %s198 = scalar_select %p197, %s196, 31
          %s199 = smul.addr %s198, 8
          %s200 = scalar_lea.vmem %s0, %s199
          %s201 = smul.u32 16, %s15
        $region36: #{ngram_forward_padded.1} parent=31 // pred_fallthru
          _
      $region32: #{ngram_forward_padded.1} parent=5 // pred_fallthru
        _
      %p202 = scmp.le.s32.totalorder 1, %s15
      %p203 = scmp.lt.s32.totalorder %s15, 3
      %p204 = pnand %p202, %p203
      %p205 = pneg %p204
      // Predicated region
      $region37: #{ngram_forward_padded.1} parent=5 // pred_check
        _
      $region38: #{ngram_forward_padded.1} parent=5 // pred_check_branch
        %207 = sbr.rel (%p204) target = $region40
      $region39: #{ngram_forward_padded.1} parent=5 // pred_region
        %s208 = ssub.s32 %s15, 1
        // Predicated region
        $region41: #{ngram_forward_padded.1} parent=39 // pred_check
          %p209 = pneg %p104
        $region42: #{ngram_forward_padded.1} parent=39 // pred_check_branch
          %211 = sbr.rel (%p209) target = $region44
        $region43: #{ngram_forward_padded.1} parent=39 // pred_region
          %213 = dma.done [#allocation3], 2048
        $region44: #{ngram_forward_padded.1} parent=39 // pred_fallthru
          _
        %s214 = smul.u32 16, %s20
        %p215 = scmp.lt.s32.totalorder %s214, 31
        %s216 = scalar_select %p215, %s214, 31
        %s217 = smul.addr %s216, 8
        %s218 = scalar_lea.vmem %s0, %s217
        %p219 = pneg %p41
        %p220 = pneg %p38
        %p221 = pneg %p62
        %p222 = pneg %p59
        %p223 = pneg %p83
        %p224 = pneg %p80
        %p225 = pneg %p104
        %p226 = pneg %p101
        %p227 = pneg %p125
        %p228 = pneg %p122
        %p229 = pneg %p151
        %p230 = pneg %p148
        %s231 = sand.u32 %s138, 1
        %s232 = scalar_lea.sflag [#allocation4], %s231
        %s233 = sand.u32 %s138, 1
        %s234 = smul.addr %s233, 128
        %s235 = scalar_lea.vmem [#allocation5], %s234
        %s236 = smul.u32 16, %s20
        %p237 = scmp.lt.s32.totalorder %s236, 31
        %s238 = scalar_select %p237, %s236, 31
        %s239 = smul.addr %s238, 8
        %s240 = scalar_lea.vmem %s0, %s239
        %s241 = smul.u32 16, %s20
        %s242 = smul.u32 16, %s20
        %v243 = vld [vmem:[%s240] sm:$0xff]
        %v244 = vld [vmem:[%s240 + $0x8] sm:$0xff]
        %v245 = vld [vmem:[%s240 + $0x10] sm:$0xff]
        %v246 = vld [vmem:[%s240 + $0x18] sm:$0xff]
        %v247 = vld [vmem:[%s240 + $0x20] sm:$0xff]
        %v248 = vld [vmem:[%s240 + $0x28] sm:$0xff]
        %v249 = vld [vmem:[%s240 + $0x30] sm:$0xff]
        %v250 = vld [vmem:[%s240 + $0x38] sm:$0xff]
        %v251 = vld [vmem:[%s240 + $0x40] sm:$0xff]
        %v252 = vld [vmem:[%s240 + $0x48] sm:$0xff]
        %v253 = vld [vmem:[%s240 + $0x50] sm:$0xff]
        %v254 = vld [vmem:[%s240 + $0x58] sm:$0xff]
        %v255 = vld [vmem:[%s240 + $0x60] sm:$0xff]
        %v256 = vld [vmem:[%s240 + $0x68] sm:$0xff]
        %v257 = vld [vmem:[%s240 + $0x70] sm:$0xff]
        %v258 = vld [vmem:[%s240 + $0x78] sm:$0xff]
        %v259 = vlaneseq
        %v260 = vand.u32 %v259, 127
        %261 = vset.pattern.permute.xlu0 0
        %262 = vperm.xlu0 %261, %v243
        %v263 = vpop.permute.xlu0 %262
        %264 = vset.pattern.permute.xlu0 0
        %265 = vperm.xlu0 %264, %v244
        %v266 = vpop.permute.xlu0 %265
        %267 = vset.pattern.permute.xlu0 0
        %268 = vperm.xlu0 %267, %v245
        %v269 = vpop.permute.xlu0 %268
        %270 = vset.pattern.permute.xlu0 0
        %271 = vperm.xlu0 %270, %v246
        %v272 = vpop.permute.xlu0 %271
        %273 = vset.pattern.permute.xlu0 0
        %274 = vperm.xlu0 %273, %v247
        %v275 = vpop.permute.xlu0 %274
        %276 = vset.pattern.permute.xlu0 0
        %277 = vperm.xlu0 %276, %v248
        %v278 = vpop.permute.xlu0 %277
        %279 = vset.pattern.permute.xlu0 0
        %280 = vperm.xlu0 %279, %v249
        %v281 = vpop.permute.xlu0 %280
        %282 = vset.pattern.permute.xlu0 0
        %283 = vperm.xlu0 %282, %v250
        %v284 = vpop.permute.xlu0 %283
        %285 = vset.pattern.permute.xlu0 0
        %286 = vperm.xlu0 %285, %v251
        %v287 = vpop.permute.xlu0 %286
        %288 = vset.pattern.permute.xlu0 0
        %289 = vperm.xlu0 %288, %v252
        %v290 = vpop.permute.xlu0 %289
        %291 = vset.pattern.permute.xlu0 0
        %292 = vperm.xlu0 %291, %v253
        %v293 = vpop.permute.xlu0 %292
        %294 = vset.pattern.permute.xlu0 0
        %295 = vperm.xlu0 %294, %v254
        %v296 = vpop.permute.xlu0 %295
        %297 = vset.pattern.permute.xlu0 0
        %298 = vperm.xlu0 %297, %v255
        %v299 = vpop.permute.xlu0 %298
        %300 = vset.pattern.permute.xlu0 0
        %301 = vperm.xlu0 %300, %v256
        %v302 = vpop.permute.xlu0 %301
        %303 = vset.pattern.permute.xlu0 0
        %304 = vperm.xlu0 %303, %v257
        %v305 = vpop.permute.xlu0 %304
        %306 = vset.pattern.permute.xlu0 0
        %307 = vperm.xlu0 %306, %v258
        %v308 = vpop.permute.xlu0 %307
        %vm309 = vcmp.eq.s32.totalorder %v263, %v260
        %vm310 = vcmp.eq.s32.totalorder %v266, %v260
        %vm311 = vcmp.eq.s32.totalorder %v269, %v260
        %vm312 = vcmp.eq.s32.totalorder %v272, %v260
        %vm313 = vcmp.eq.s32.totalorder %v275, %v260
        %vm314 = vcmp.eq.s32.totalorder %v278, %v260
        %vm315 = vcmp.eq.s32.totalorder %v281, %v260
        %vm316 = vcmp.eq.s32.totalorder %v284, %v260
        %vm317 = vcmp.eq.s32.totalorder %v287, %v260
        %vm318 = vcmp.eq.s32.totalorder %v290, %v260
        %vm319 = vcmp.eq.s32.totalorder %v293, %v260
        %vm320 = vcmp.eq.s32.totalorder %v296, %v260
        %vm321 = vcmp.eq.s32.totalorder %v299, %v260
        %vm322 = vcmp.eq.s32.totalorder %v302, %v260
        %vm323 = vcmp.eq.s32.totalorder %v305, %v260
        %vm324 = vcmp.eq.s32.totalorder %v308, %v260
        %v325 = vsel %vm309, 1, 0
        %v326 = vsel %vm310, 1, 0
        %v327 = vsel %vm311, 1, 0
        %v328 = vsel %vm312, 1, 0
        %v329 = vsel %vm313, 1, 0
        %v330 = vsel %vm314, 1, 0
        %v331 = vsel %vm315, 1, 0
        %v332 = vsel %vm316, 1, 0
        %v333 = vsel %vm317, 1, 0
        %v334 = vsel %vm318, 1, 0
        %v335 = vsel %vm319, 1, 0
        %v336 = vsel %vm320, 1, 0
        %v337 = vsel %vm321, 1, 0
        %v338 = vsel %vm322, 1, 0
        %v339 = vsel %vm323, 1, 0
        %v340 = vsel %vm324, 1, 0
        %v341 = vcvt.s32.f32 %v325
        %v342 = vcvt.s32.f32 %v326
        %v343 = vcvt.s32.f32 %v327
        %v344 = vcvt.s32.f32 %v328
        %v345 = vcvt.s32.f32 %v329
        %v346 = vcvt.s32.f32 %v330
        %v347 = vcvt.s32.f32 %v331
        %v348 = vcvt.s32.f32 %v332
        %v349 = vcvt.s32.f32 %v333
        %v350 = vcvt.s32.f32 %v334
        %v351 = vcvt.s32.f32 %v335
        %v352 = vcvt.s32.f32 %v336
        %v353 = vcvt.s32.f32 %v337
        %v354 = vcvt.s32.f32 %v338
        %v355 = vcvt.s32.f32 %v339
        %v356 = vcvt.s32.f32 %v340
        %357 = vset.pattern.permute.xlu0 1
        %358 = vperm.xlu0 %357, %v243
        %v359 = vpop.permute.xlu0 %358
        %360 = vset.pattern.permute.xlu0 1
        %361 = vperm.xlu0 %360, %v244
        %v362 = vpop.permute.xlu0 %361
        %363 = vset.pattern.permute.xlu0 1
        %364 = vperm.xlu0 %363, %v245
        %v365 = vpop.permute.xlu0 %364
        %366 = vset.pattern.permute.xlu0 1
        %367 = vperm.xlu0 %366, %v246
        %v368 = vpop.permute.xlu0 %367
        %369 = vset.pattern.permute.xlu0 1
        %370 = vperm.xlu0 %369, %v247
        %v371 = vpop.permute.xlu0 %370
        %372 = vset.pattern.permute.xlu0 1
        %373 = vperm.xlu0 %372, %v248
        %v374 = vpop.permute.xlu0 %373
        %375 = vset.pattern.permute.xlu0 1
        %376 = vperm.xlu0 %375, %v249
        %v377 = vpop.permute.xlu0 %376
        %378 = vset.pattern.permute.xlu0 1
        %379 = vperm.xlu0 %378, %v250
        %v380 = vpop.permute.xlu0 %379
        %381 = vset.pattern.permute.xlu0 1
        %382 = vperm.xlu0 %381, %v251
        %v383 = vpop.permute.xlu0 %382
        %384 = vset.pattern.permute.xlu0 1
        %385 = vperm.xlu0 %384, %v252
        %v386 = vpop.permute.xlu0 %385
        %387 = vset.pattern.permute.xlu0 1
        %388 = vperm.xlu0 %387, %v253
        %v389 = vpop.permute.xlu0 %388
        %390 = vset.pattern.permute.xlu0 1
        %391 = vperm.xlu0 %390, %v254
        %v392 = vpop.permute.xlu0 %391
        %393 = vset.pattern.permute.xlu0 1
        %394 = vperm.xlu0 %393, %v255
        %v395 = vpop.permute.xlu0 %394
        %396 = vset.pattern.permute.xlu0 1
        %397 = vperm.xlu0 %396, %v256
        %v398 = vpop.permute.xlu0 %397
        %399 = vset.pattern.permute.xlu0 1
        %400 = vperm.xlu0 %399, %v257
        %v401 = vpop.permute.xlu0 %400
        %402 = vset.pattern.permute.xlu0 1
        %403 = vperm.xlu0 %402, %v258
        %v404 = vpop.permute.xlu0 %403
        %vm405 = vcmp.eq.s32.totalorder %v359, %v260
        %vm406 = vcmp.eq.s32.totalorder %v362, %v260
        %vm407 = vcmp.eq.s32.totalorder %v365, %v260
        %vm408 = vcmp.eq.s32.totalorder %v368, %v260
        %vm409 = vcmp.eq.s32.totalorder %v371, %v260
        %vm410 = vcmp.eq.s32.totalorder %v374, %v260
        %vm411 = vcmp.eq.s32.totalorder %v377, %v260
        %vm412 = vcmp.eq.s32.totalorder %v380, %v260
        %vm413 = vcmp.eq.s32.totalorder %v383, %v260
        %vm414 = vcmp.eq.s32.totalorder %v386, %v260
        %vm415 = vcmp.eq.s32.totalorder %v389, %v260
        %vm416 = vcmp.eq.s32.totalorder %v392, %v260
        %vm417 = vcmp.eq.s32.totalorder %v395, %v260
        %vm418 = vcmp.eq.s32.totalorder %v398, %v260
        %vm419 = vcmp.eq.s32.totalorder %v401, %v260
        %vm420 = vcmp.eq.s32.totalorder %v404, %v260
        %v421 = vsel %vm405, 1, 0
        %v422 = vsel %vm406, 1, 0
        %v423 = vsel %vm407, 1, 0
        %v424 = vsel %vm408, 1, 0
        %v425 = vsel %vm409, 1, 0
        %v426 = vsel %vm410, 1, 0
        %v427 = vsel %vm411, 1, 0
        %v428 = vsel %vm412, 1, 0
        %v429 = vsel %vm413, 1, 0
        %v430 = vsel %vm414, 1, 0
        %v431 = vsel %vm415, 1, 0
        %v432 = vsel %vm416, 1, 0
        %v433 = vsel %vm417, 1, 0
        %v434 = vsel %vm418, 1, 0
        %v435 = vsel %vm419, 1, 0
        %v436 = vsel %vm420, 1, 0
        %v437 = vcvt.s32.f32 %v421
        %v438 = vcvt.s32.f32 %v422
        %v439 = vcvt.s32.f32 %v423
        %v440 = vcvt.s32.f32 %v424
        %v441 = vcvt.s32.f32 %v425
        %v442 = vcvt.s32.f32 %v426
        %v443 = vcvt.s32.f32 %v427
        %v444 = vcvt.s32.f32 %v428
        %v445 = vcvt.s32.f32 %v429
        %v446 = vcvt.s32.f32 %v430
        %v447 = vcvt.s32.f32 %v431
        %v448 = vcvt.s32.f32 %v432
        %v449 = vcvt.s32.f32 %v433
        %v450 = vcvt.s32.f32 %v434
        %v451 = vcvt.s32.f32 %v435
        %v452 = vcvt.s32.f32 %v436
        %v453 = vld [vmem:[%s1] sm:$0xff]
        %v454 = vld [vmem:[%s1 + $0x8] sm:$0xff]
        %v455 = vld [vmem:[%s1 + $0x10] sm:$0xff]
        %v456 = vld [vmem:[%s1 + $0x18] sm:$0xff]
        %v457 = vld [vmem:[%s1 + $0x20] sm:$0xff]
        %v458 = vld [vmem:[%s1 + $0x28] sm:$0xff]
        %v459 = vld [vmem:[%s1 + $0x30] sm:$0xff]
        %v460 = vld [vmem:[%s1 + $0x38] sm:$0xff]
        %v461 = vld [vmem:[%s1 + $0x40] sm:$0xff]
        %v462 = vld [vmem:[%s1 + $0x48] sm:$0xff]
        %v463 = vld [vmem:[%s1 + $0x50] sm:$0xff]
        %v464 = vld [vmem:[%s1 + $0x58] sm:$0xff]
        %v465 = vld [vmem:[%s1 + $0x60] sm:$0xff]
        %v466 = vld [vmem:[%s1 + $0x68] sm:$0xff]
        %v467 = vld [vmem:[%s1 + $0x70] sm:$0xff]
        %v468 = vld [vmem:[%s1 + $0x78] sm:$0xff]
        %v469 = vld [vmem:[%s1 + $0x80] sm:$0xff]
        %v470 = vld [vmem:[%s1 + $0x88] sm:$0xff]
        %v471 = vld [vmem:[%s1 + $0x90] sm:$0xff]
        %v472 = vld [vmem:[%s1 + $0x98] sm:$0xff]
        %v473 = vld [vmem:[%s1 + $0xa0] sm:$0xff]
        %v474 = vld [vmem:[%s1 + $0xa8] sm:$0xff]
        %v475 = vld [vmem:[%s1 + $0xb0] sm:$0xff]
        %v476 = vld [vmem:[%s1 + $0xb8] sm:$0xff]
        %v477 = vld [vmem:[%s1 + $0xc0] sm:$0xff]
        %v478 = vld [vmem:[%s1 + $0xc8] sm:$0xff]
        %v479 = vld [vmem:[%s1 + $0xd0] sm:$0xff]
        %v480 = vld [vmem:[%s1 + $0xd8] sm:$0xff]
        %v481 = vld [vmem:[%s1 + $0xe0] sm:$0xff]
        %v482 = vld [vmem:[%s1 + $0xe8] sm:$0xff]
        %v483 = vld [vmem:[%s1 + $0xf0] sm:$0xff]
        %v484 = vld [vmem:[%s1 + $0xf8] sm:$0xff]
        %v485 = vld [vmem:[%s2] sm:$0x1]
        %v487 = vperm.slane %v485, 0
        %489 = vmatpush.msra.mxu0 %v468
        %490 = vmatpush.msra.mxu0 %v467
        %491 = vmatpush.msra.mxu0 %v466
        %492 = vmatpush.msra.mxu0 %v465
        %493 = vmatpush.msra.mxu0 %v464
        %494 = vmatpush.msra.mxu0 %v463
        %495 = vmatpush.msra.mxu0 %v462
        %496 = vmatpush.msra.mxu0 %v461
        %497 = vmatpush.msra.mxu0 %v460
        %498 = vmatpush.msra.mxu0 %v459
        %499 = vmatpush.msra.mxu0 %v458
        %500 = vmatpush.msra.mxu0 %v457
        %501 = vmatpush.msra.mxu0 %v456
        %502 = vmatpush.msra.mxu0 %v455
        %503 = vmatpush.msra.mxu0 %v454
        %504 = vmatpush.msra.mxu0 %v453
        %505 = vmatmul.f32.gmra.mxu0 %v341
        %v506 = vpop.f32.mrf.mxu0
        %v507 = vadd.f32 %v487, %v506
        %508 = vmatmul.f32.gmra.mxu0 %v342
        %v509 = vpop.f32.mrf.mxu0
        %v510 = vadd.f32 %v487, %v509
        %511 = vmatmul.f32.gmra.mxu0 %v343
        %v512 = vpop.f32.mrf.mxu0
        %v513 = vadd.f32 %v487, %v512
        %514 = vmatmul.f32.gmra.mxu0 %v344
        %v515 = vpop.f32.mrf.mxu0
        %v516 = vadd.f32 %v487, %v515
        %517 = vmatmul.f32.gmra.mxu0 %v345
        %v518 = vpop.f32.mrf.mxu0
        %v519 = vadd.f32 %v487, %v518
        %520 = vmatmul.f32.gmra.mxu0 %v346
        %v521 = vpop.f32.mrf.mxu0
        %v522 = vadd.f32 %v487, %v521
        %523 = vmatmul.f32.gmra.mxu0 %v347
        %v524 = vpop.f32.mrf.mxu0
        %v525 = vadd.f32 %v487, %v524
        %526 = vmatmul.f32.gmra.mxu0 %v348
        %v527 = vpop.f32.mrf.mxu0
        %v528 = vadd.f32 %v487, %v527
        %529 = vmatmul.f32.gmra.mxu0 %v349
        %v530 = vpop.f32.mrf.mxu0
        %v531 = vadd.f32 %v487, %v530
        %532 = vmatmul.f32.gmra.mxu0 %v350
        %v533 = vpop.f32.mrf.mxu0
        %v534 = vadd.f32 %v487, %v533
        %535 = vmatmul.f32.gmra.mxu0 %v351
        %v536 = vpop.f32.mrf.mxu0
        %v537 = vadd.f32 %v487, %v536
        %538 = vmatmul.f32.gmra.mxu0 %v352
        %v539 = vpop.f32.mrf.mxu0
        %v540 = vadd.f32 %v487, %v539
        %541 = vmatmul.f32.gmra.mxu0 %v353
        %v542 = vpop.f32.mrf.mxu0
        %v543 = vadd.f32 %v487, %v542
        %544 = vmatmul.f32.gmra.mxu0 %v354
        %v545 = vpop.f32.mrf.mxu0
        %v546 = vadd.f32 %v487, %v545
        %547 = vmatmul.f32.gmra.mxu0 %v355
        %v548 = vpop.f32.mrf.mxu0
        %v549 = vadd.f32 %v487, %v548
        %550 = vmatmul.f32.gmra.mxu0 %v356
        %v551 = vpop.f32.mrf.mxu0
        %v552 = vadd.f32 %v487, %v551
        %553 = vdwg.mxu0
        %554 = vmatpush.msra.mxu0 %v484
        %555 = vmatpush.msra.mxu0 %v483
        %556 = vmatpush.msra.mxu0 %v482
        %557 = vmatpush.msra.mxu0 %v481
        %558 = vmatpush.msra.mxu0 %v480
        %559 = vmatpush.msra.mxu0 %v479
        %560 = vmatpush.msra.mxu0 %v478
        %561 = vmatpush.msra.mxu0 %v477
        %562 = vmatpush.msra.mxu0 %v476
        %563 = vmatpush.msra.mxu0 %v475
        %564 = vmatpush.msra.mxu0 %v474
        %565 = vmatpush.msra.mxu0 %v473
        %566 = vmatpush.msra.mxu0 %v472
        %567 = vmatpush.msra.mxu0 %v471
        %568 = vmatpush.msra.mxu0 %v470
        %569 = vmatpush.msra.mxu0 %v469
        %570 = vmatmul.f32.gmra.mxu0 %v437
        %v571 = vpop.f32.mrf.mxu0
        %v572 = vadd.f32 %v507, %v571
        %573 = vmatmul.f32.gmra.mxu0 %v438
        %v574 = vpop.f32.mrf.mxu0
        %v575 = vadd.f32 %v510, %v574
        %576 = vmatmul.f32.gmra.mxu0 %v439
        %v577 = vpop.f32.mrf.mxu0
        %v578 = vadd.f32 %v513, %v577
        %579 = vmatmul.f32.gmra.mxu0 %v440
        %v580 = vpop.f32.mrf.mxu0
        %v581 = vadd.f32 %v516, %v580
        %582 = vmatmul.f32.gmra.mxu0 %v441
        %v583 = vpop.f32.mrf.mxu0
        %v584 = vadd.f32 %v519, %v583
        %585 = vmatmul.f32.gmra.mxu0 %v442
        %v586 = vpop.f32.mrf.mxu0
        %v587 = vadd.f32 %v522, %v586
        %588 = vmatmul.f32.gmra.mxu0 %v443
        %v589 = vpop.f32.mrf.mxu0
        %v590 = vadd.f32 %v525, %v589
        %591 = vmatmul.f32.gmra.mxu0 %v444
        %v592 = vpop.f32.mrf.mxu0
        %v593 = vadd.f32 %v528, %v592
        %594 = vmatmul.f32.gmra.mxu0 %v445
        %v595 = vpop.f32.mrf.mxu0
        %v596 = vadd.f32 %v531, %v595
        %597 = vmatmul.f32.gmra.mxu0 %v446
        %v598 = vpop.f32.mrf.mxu0
        %v599 = vadd.f32 %v534, %v598
        %600 = vmatmul.f32.gmra.mxu0 %v447
        %v601 = vpop.f32.mrf.mxu0
        %v602 = vadd.f32 %v537, %v601
        %603 = vmatmul.f32.gmra.mxu0 %v448
        %v604 = vpop.f32.mrf.mxu0
        %v605 = vadd.f32 %v540, %v604
        %606 = vmatmul.f32.gmra.mxu0 %v449
        %v607 = vpop.f32.mrf.mxu0
        %v608 = vadd.f32 %v543, %v607
        %609 = vmatmul.f32.gmra.mxu0 %v450
        %v610 = vpop.f32.mrf.mxu0
        %v611 = vadd.f32 %v546, %v610
        %612 = vmatmul.f32.gmra.mxu0 %v451
        %v613 = vpop.f32.mrf.mxu0
        %v614 = vadd.f32 %v549, %v613
        %615 = vmatmul.f32.gmra.mxu0 %v452
        %v616 = vpop.f32.mrf.mxu0
        %v617 = vadd.f32 %v552, %v616
        %618 = vdwg.mxu0
        %v619 = vmax.f32 %v572, 0.0
        %v620 = vmax.f32 %v575, 0.0
        %v621 = vmax.f32 %v578, 0.0
        %v622 = vmax.f32 %v581, 0.0
        %v623 = vmax.f32 %v584, 0.0
        %v624 = vmax.f32 %v587, 0.0
        %v625 = vmax.f32 %v590, 0.0
        %v626 = vmax.f32 %v593, 0.0
        %v627 = vmax.f32 %v596, 0.0
        %v628 = vmax.f32 %v599, 0.0
        %v629 = vmax.f32 %v602, 0.0
        %v630 = vmax.f32 %v605, 0.0
        %v631 = vmax.f32 %v608, 0.0
        %v632 = vmax.f32 %v611, 0.0
        %v633 = vmax.f32 %v614, 0.0
        %v634 = vmax.f32 %v617, 0.0
        %v635 = vld [vmem:[#allocation2] sm:$0xff]
        %v636 = vld [vmem:[#allocation2 + $0x8] sm:$0xff]
        %v637 = vld [vmem:[#allocation2 + $0x10] sm:$0xff]
        %v638 = vld [vmem:[#allocation2 + $0x18] sm:$0xff]
        %v639 = vld [vmem:[#allocation2 + $0x20] sm:$0xff]
        %v640 = vld [vmem:[#allocation2 + $0x28] sm:$0xff]
        %v641 = vld [vmem:[#allocation2 + $0x30] sm:$0xff]
        %v642 = vld [vmem:[#allocation2 + $0x38] sm:$0xff]
        %v643 = vld [vmem:[#allocation2 + $0x40] sm:$0xff]
        %v644 = vld [vmem:[#allocation2 + $0x48] sm:$0xff]
        %v645 = vld [vmem:[#allocation2 + $0x50] sm:$0xff]
        %v646 = vld [vmem:[#allocation2 + $0x58] sm:$0xff]
        %v647 = vld [vmem:[#allocation2 + $0x60] sm:$0xff]
        %v648 = vld [vmem:[#allocation2 + $0x68] sm:$0xff]
        %v649 = vld [vmem:[#allocation2 + $0x70] sm:$0xff]
        %v650 = vld [vmem:[#allocation2 + $0x78] sm:$0xff]
        %v651 = vld [vmem:[%s4] sm:$0x1]
        %v653 = vperm.slane %v651, 0
        %655 = vmatpush.msra.mxu0 %v650
        %656 = vmatpush.msra.mxu0 %v649
        %657 = vmatpush.msra.mxu0 %v648
        %658 = vmatpush.msra.mxu0 %v647
        %659 = vmatpush.msra.mxu0 %v646
        %660 = vmatpush.msra.mxu0 %v645
        %661 = vmatpush.msra.mxu0 %v644
        %662 = vmatpush.msra.mxu0 %v643
        %663 = vmatpush.msra.mxu0 %v642
        %664 = vmatpush.msra.mxu0 %v641
        %665 = vmatpush.msra.mxu0 %v640
        %666 = vmatpush.msra.mxu0 %v639
        %667 = vmatpush.msra.mxu0 %v638
        %668 = vmatpush.msra.mxu0 %v637
        %669 = vmatpush.msra.mxu0 %v636
        %670 = vmatpush.msra.mxu0 %v635
        %671 = vmatmul.f32.gmra.mxu0 %v619
        %v672 = vpop.f32.mrf.mxu0
        %v673 = vadd.f32 %v653, %v672
        %674 = vmatmul.f32.gmra.mxu0 %v620
        %v675 = vpop.f32.mrf.mxu0
        %v676 = vadd.f32 %v653, %v675
        %677 = vmatmul.f32.gmra.mxu0 %v621
        %v678 = vpop.f32.mrf.mxu0
        %v679 = vadd.f32 %v653, %v678
        %680 = vmatmul.f32.gmra.mxu0 %v622
        %v681 = vpop.f32.mrf.mxu0
        %v682 = vadd.f32 %v653, %v681
        %683 = vmatmul.f32.gmra.mxu0 %v623
        %v684 = vpop.f32.mrf.mxu0
        %v685 = vadd.f32 %v653, %v684
        %686 = vmatmul.f32.gmra.mxu0 %v624
        %v687 = vpop.f32.mrf.mxu0
        %v688 = vadd.f32 %v653, %v687
        %689 = vmatmul.f32.gmra.mxu0 %v625
        %v690 = vpop.f32.mrf.mxu0
        %v691 = vadd.f32 %v653, %v690
        %692 = vmatmul.f32.gmra.mxu0 %v626
        %v693 = vpop.f32.mrf.mxu0
        %v694 = vadd.f32 %v653, %v693
        %695 = vmatmul.f32.gmra.mxu0 %v627
        %v696 = vpop.f32.mrf.mxu0
        %v697 = vadd.f32 %v653, %v696
        %698 = vmatmul.f32.gmra.mxu0 %v628
        %v699 = vpop.f32.mrf.mxu0
        %v700 = vadd.f32 %v653, %v699
        %701 = vmatmul.f32.gmra.mxu0 %v629
        %v702 = vpop.f32.mrf.mxu0
        %v703 = vadd.f32 %v653, %v702
        %704 = vmatmul.f32.gmra.mxu0 %v630
        %v705 = vpop.f32.mrf.mxu0
        %v706 = vadd.f32 %v653, %v705
        %707 = vmatmul.f32.gmra.mxu0 %v631
        %v708 = vpop.f32.mrf.mxu0
        %v709 = vadd.f32 %v653, %v708
        %710 = vmatmul.f32.gmra.mxu0 %v632
        %v711 = vpop.f32.mrf.mxu0
        %v712 = vadd.f32 %v653, %v711
        %713 = vmatmul.f32.gmra.mxu0 %v633
        %v714 = vpop.f32.mrf.mxu0
        %v715 = vadd.f32 %v653, %v714
        %716 = vmatmul.f32.gmra.mxu0 %v634
        %v717 = vpop.f32.mrf.mxu0
        %v718 = vadd.f32 %v653, %v717
        %719 = vdwg.mxu0
        %720 = vmax.xlane.f32.xlu0 %v673
        %v721 = vpop.xlane.xlu0 %720
        %722 = vmax.xlane.f32.xlu0 %v676
        %v723 = vpop.xlane.xlu0 %722
        %724 = vmax.xlane.f32.xlu0 %v679
        %v725 = vpop.xlane.xlu0 %724
        %726 = vmax.xlane.f32.xlu0 %v682
        %v727 = vpop.xlane.xlu0 %726
        %728 = vmax.xlane.f32.xlu0 %v685
        %v729 = vpop.xlane.xlu0 %728
        %730 = vmax.xlane.f32.xlu0 %v688
        %v731 = vpop.xlane.xlu0 %730
        %732 = vmax.xlane.f32.xlu0 %v691
        %v733 = vpop.xlane.xlu0 %732
        %734 = vmax.xlane.f32.xlu0 %v694
        %v735 = vpop.xlane.xlu0 %734
        %736 = vmax.xlane.f32.xlu0 %v697
        %v737 = vpop.xlane.xlu0 %736
        %738 = vmax.xlane.f32.xlu0 %v700
        %v739 = vpop.xlane.xlu0 %738
        %740 = vmax.xlane.f32.xlu0 %v703
        %v741 = vpop.xlane.xlu0 %740
        %742 = vmax.xlane.f32.xlu0 %v706
        %v743 = vpop.xlane.xlu0 %742
        %744 = vmax.xlane.f32.xlu0 %v709
        %v745 = vpop.xlane.xlu0 %744
        %746 = vmax.xlane.f32.xlu0 %v712
        %v747 = vpop.xlane.xlu0 %746
        %748 = vmax.xlane.f32.xlu0 %v715
        %v749 = vpop.xlane.xlu0 %748
        %750 = vmax.xlane.f32.xlu0 %v718
        %v751 = vpop.xlane.xlu0 %750
        %v752 = vsub.f32 %v673, %v721
        %v753 = vsub.f32 %v676, %v723
        %v754 = vsub.f32 %v679, %v725
        %v755 = vsub.f32 %v682, %v727
        %v756 = vsub.f32 %v685, %v729
        %v757 = vsub.f32 %v688, %v731
        %v758 = vsub.f32 %v691, %v733
        %v759 = vsub.f32 %v694, %v735
        %v760 = vsub.f32 %v697, %v737
        %v761 = vsub.f32 %v700, %v739
        %v762 = vsub.f32 %v703, %v741
        %v763 = vsub.f32 %v706, %v743
        %v764 = vsub.f32 %v709, %v745
        %v765 = vsub.f32 %v712, %v747
        %v766 = vsub.f32 %v715, %v749
        %v767 = vsub.f32 %v718, %v751
        %v768 = vmul.f32 %v752, 1.442695
        %v769 = vpow.pop %v768
        %v770 = vmul.f32 %v753, 1.442695
        %v771 = vpow.pop %v770
        %v772 = vmul.f32 %v754, 1.442695
        %v773 = vpow.pop %v772
        %v774 = vmul.f32 %v755, 1.442695
        %v775 = vpow.pop %v774
        %v776 = vmul.f32 %v756, 1.442695
        %v777 = vpow.pop %v776
        %v778 = vmul.f32 %v757, 1.442695
        %v779 = vpow.pop %v778
        %v780 = vmul.f32 %v758, 1.442695
        %v781 = vpow.pop %v780
        %v782 = vmul.f32 %v759, 1.442695
        %v783 = vpow.pop %v782
        %v784 = vmul.f32 %v760, 1.442695
        %v785 = vpow.pop %v784
        %v786 = vmul.f32 %v761, 1.442695
        %v787 = vpow.pop %v786
        %v788 = vmul.f32 %v762, 1.442695
        %v789 = vpow.pop %v788
        %v790 = vmul.f32 %v763, 1.442695
        %v791 = vpow.pop %v790
        %v792 = vmul.f32 %v764, 1.442695
        %v793 = vpow.pop %v792
        %v794 = vmul.f32 %v765, 1.442695
        %v795 = vpow.pop %v794
        %v796 = vmul.f32 %v766, 1.442695
        %v797 = vpow.pop %v796
        %v798 = vmul.f32 %v767, 1.442695
        %v799 = vpow.pop %v798
        %800 = vadd.xlane.f32.xlu0 %v769
        %v801 = vpop.xlane.xlu0 %800
        %802 = vadd.xlane.f32.xlu0 %v771
        %v803 = vpop.xlane.xlu0 %802
        %804 = vadd.xlane.f32.xlu0 %v773
        %v805 = vpop.xlane.xlu0 %804
        %806 = vadd.xlane.f32.xlu0 %v775
        %v807 = vpop.xlane.xlu0 %806
        %808 = vadd.xlane.f32.xlu0 %v777
        %v809 = vpop.xlane.xlu0 %808
        %810 = vadd.xlane.f32.xlu0 %v779
        %v811 = vpop.xlane.xlu0 %810
        %812 = vadd.xlane.f32.xlu0 %v781
        %v813 = vpop.xlane.xlu0 %812
        %814 = vadd.xlane.f32.xlu0 %v783
        %v815 = vpop.xlane.xlu0 %814
        %816 = vadd.xlane.f32.xlu0 %v785
        %v817 = vpop.xlane.xlu0 %816
        %818 = vadd.xlane.f32.xlu0 %v787
        %v819 = vpop.xlane.xlu0 %818
        %820 = vadd.xlane.f32.xlu0 %v789
        %v821 = vpop.xlane.xlu0 %820
        %822 = vadd.xlane.f32.xlu0 %v791
        %v823 = vpop.xlane.xlu0 %822
        %824 = vadd.xlane.f32.xlu0 %v793
        %v825 = vpop.xlane.xlu0 %824
        %826 = vadd.xlane.f32.xlu0 %v795
        %v827 = vpop.xlane.xlu0 %826
        %828 = vadd.xlane.f32.xlu0 %v797
        %v829 = vpop.xlane.xlu0 %828
        %830 = vadd.xlane.f32.xlu0 %v799
        %v831 = vpop.xlane.xlu0 %830
        %v832 = vlog2.pop %v801
        %v833 = vmul.f32 %v832, 0.6931472
        %v834 = vlog2.pop %v803
        %v835 = vmul.f32 %v834, 0.6931472
        %v836 = vlog2.pop %v805
        %v837 = vmul.f32 %v836, 0.6931472
        %v838 = vlog2.pop %v807
        %v839 = vmul.f32 %v838, 0.6931472
        %v840 = vlog2.pop %v809
        %v841 = vmul.f32 %v840, 0.6931472
        %v842 = vlog2.pop %v811
        %v843 = vmul.f32 %v842, 0.6931472
        %v844 = vlog2.pop %v813
        %v845 = vmul.f32 %v844, 0.6931472
        %v846 = vlog2.pop %v815
        %v847 = vmul.f32 %v846, 0.6931472
        %v848 = vlog2.pop %v817
        %v849 = vmul.f32 %v848, 0.6931472
        %v850 = vlog2.pop %v819
        %v851 = vmul.f32 %v850, 0.6931472
        %v852 = vlog2.pop %v821
        %v853 = vmul.f32 %v852, 0.6931472
        %v854 = vlog2.pop %v823
        %v855 = vmul.f32 %v854, 0.6931472
        %v856 = vlog2.pop %v825
        %v857 = vmul.f32 %v856, 0.6931472
        %v858 = vlog2.pop %v827
        %v859 = vmul.f32 %v858, 0.6931472
        %v860 = vlog2.pop %v829
        %v861 = vmul.f32 %v860, 0.6931472
        %v862 = vlog2.pop %v831
        %v863 = vmul.f32 %v862, 0.6931472
        %v864 = vadd.f32 %v721, %v833
        %v865 = vadd.f32 %v723, %v835
        %v866 = vadd.f32 %v725, %v837
        %v867 = vadd.f32 %v727, %v839
        %v868 = vadd.f32 %v729, %v841
        %v869 = vadd.f32 %v731, %v843
        %v870 = vadd.f32 %v733, %v845
        %v871 = vadd.f32 %v735, %v847
        %v872 = vadd.f32 %v737, %v849
        %v873 = vadd.f32 %v739, %v851
        %v874 = vadd.f32 %v741, %v853
        %v875 = vadd.f32 %v743, %v855
        %v876 = vadd.f32 %v745, %v857
        %v877 = vadd.f32 %v747, %v859
        %v878 = vadd.f32 %v749, %v861
        %v879 = vadd.f32 %v751, %v863
        %v880 = vsub.f32 %v673, %v864
        %v881 = vsub.f32 %v676, %v865
        %v882 = vsub.f32 %v679, %v866
        %v883 = vsub.f32 %v682, %v867
        %v884 = vsub.f32 %v685, %v868
        %v885 = vsub.f32 %v688, %v869
        %v886 = vsub.f32 %v691, %v870
        %v887 = vsub.f32 %v694, %v871
        %v888 = vsub.f32 %v697, %v872
        %v889 = vsub.f32 %v700, %v873
        %v890 = vsub.f32 %v703, %v874
        %v891 = vsub.f32 %v706, %v875
        %v892 = vsub.f32 %v709, %v876
        %v893 = vsub.f32 %v712, %v877
        %v894 = vsub.f32 %v715, %v878
        %v895 = vsub.f32 %v718, %v879
        %896 = vst [vmem:[%s235] sm:$0xff] %v880
        %897 = vst [vmem:[%s235 + $0x8] sm:$0xff] %v881
        %898 = vst [vmem:[%s235 + $0x10] sm:$0xff] %v882
        %899 = vst [vmem:[%s235 + $0x18] sm:$0xff] %v883
        %900 = vst [vmem:[%s235 + $0x20] sm:$0xff] %v884
        %901 = vst [vmem:[%s235 + $0x28] sm:$0xff] %v885
        %902 = vst [vmem:[%s235 + $0x30] sm:$0xff] %v886
        %903 = vst [vmem:[%s235 + $0x38] sm:$0xff] %v887
        %904 = vst [vmem:[%s235 + $0x40] sm:$0xff] %v888
        %905 = vst [vmem:[%s235 + $0x48] sm:$0xff] %v889
        %906 = vst [vmem:[%s235 + $0x50] sm:$0xff] %v890
        %907 = vst [vmem:[%s235 + $0x58] sm:$0xff] %v891
        %908 = vst [vmem:[%s235 + $0x60] sm:$0xff] %v892
        %909 = vst [vmem:[%s235 + $0x68] sm:$0xff] %v893
        %910 = vst [vmem:[%s235 + $0x70] sm:$0xff] %v894
        %911 = vst [vmem:[%s235 + $0x78] sm:$0xff] %v895
        %s912 = sand.u32 %s138, 1
        %s913 = scalar_lea.sflag [#allocation4], %s912
        %s914 = sand.u32 %s138, 1
        %s915 = smul.addr %s914, 128
        %s916 = scalar_lea.vmem [#allocation5], %s915
        // Predicated region
        $region45: #{ngram_forward_padded.1} parent=39 // pred_check
          %p917 = pneg %p148
        $region46: #{ngram_forward_padded.1} parent=39 // pred_check_branch
          %919 = sbr.rel (%p917) target = $region48
        $region47: #{ngram_forward_padded.1} parent=39 // pred_region
          %s920 = smul.u32 16, %s20
          %922 = vsyncadd %s913, 0
          %s923 = smul.addr %s920, 8
          %s924 = scalar_lea.hbm %s5, %s923
          %s925 = sshll.u32 %s916, 4
          %s926 = int_to_ptr.vmem [resolvable:$true] %s925
          %s927 = sshll.u32 %s924, 4
          %s928 = int_to_ptr.hbm [resolvable:$true] %s927
          %933 = dma.vmem_to_hbm [thread:$0]  %s926, 2048, %s928, %s913, 128, 128, 8
        $region48: #{ngram_forward_padded.1} parent=39 // pred_fallthru
          _
      $region40: #{ngram_forward_padded.1} parent=5 // pred_fallthru
        _
      %p934 = scmp.le.s32.totalorder 2, %s15
      // Predicated region
      $region49: #{ngram_forward_padded.1} parent=5 // pred_check
        %p935 = pneg %p934
      $region50: #{ngram_forward_padded.1} parent=5 // pred_check_branch
        %937 = sbr.rel (%p935) target = $region52
      $region51: #{ngram_forward_padded.1} parent=5 // pred_region
        %s938 = ssub.s32 %s15, 2
        // Predicated region
        $region53: #{ngram_forward_padded.1} parent=51 // pred_check
          %p939 = pneg %p154
        $region54: #{ngram_forward_padded.1} parent=51 // pred_check_branch
          %941 = sbr.rel (%p939) target = $region56
        $region55: #{ngram_forward_padded.1} parent=51 // pred_region
          %s942 = sand.u32 %s139, 1
          %s943 = scalar_lea.sflag [#allocation4], %s942
          %s944 = sand.u32 %s139, 1
          %s945 = smul.addr %s944, 128
          %s946 = scalar_lea.vmem [#allocation5], %s945
          %948 = dma.done %s943, 2048
        $region56: #{ngram_forward_padded.1} parent=51 // pred_fallthru
          _
      $region52: #{ngram_forward_padded.1} parent=5 // pred_fallthru
        _
    $region6: #{ngram_forward_padded.1} parent=1 // loop_footer
      %s19 = sadd.s32 1, %s15
    $region7: #{ngram_forward_padded.1} parent=1 // loop_footer_branch
      %14 = sbr.rel target = $region3
    $region8: #{ngram_forward_padded.1} parent=1 // loop_exit
      _
    %949 = vsyncpa [#allocation3], 1
    %s950 = scalar_lea.sflag [#allocation3], 1
    %951 = vsyncpa %s950, 1
    %952 = vsyncpa [#allocation4], 1
    %s953 = scalar_lea.sflag [#allocation4], 1
    %954 = vsyncpa %s953, 1

</llo_original>
